<compile_context>
chip_gen: v7x
topology: tpu7x:2x2x1
jax: 0.10.0
libtpu: 0.0.40
codegen_flags: <defaults>
</compile_context>

<pallas_src>
import math
import functools

import jax
import jax.numpy as jnp
from jax.experimental import pallas as pl
from jax.experimental.pallas import tpu as pltpu

LANE = 128
SUBLANE = 8
NEG_FILL = -100000000.0   # matches torch masked_fill_ constant
PAD_BIAS = -1.0e30        # padded label columns -> exp() == 0 in softmax


def _ceil_to(x, m):
    return ((x + m - 1) // m) * m


# --------------------------------------------------------------------------
# In-kernel exact (erf) GELU.  Abramowitz & Stegun 7.1.26 erf approximation,
# |err| <= 1.5e-7 (f32-accurate), uses only VPU/EUP ops (exp, mul, add, where).
# --------------------------------------------------------------------------
def _erf(x):
    p = 0.3275911
    a1, a2, a3, a4, a5 = (0.254829592, -0.284496736, 1.421413741,
                          -1.453152027, 1.061405429)
    ax = jnp.abs(x)
    t = 1.0 / (1.0 + p * ax)
    poly = ((((a5 * t + a4) * t + a3) * t + a2) * t + a1) * t
    y = 1.0 - poly * jnp.exp(-ax * ax)
    return jnp.where(x >= 0.0, y, -y)


def _gelu(x):
    # exact-erf GELU (torch.nn.GELU() default), f32 math
    return 0.5 * x * (1.0 + _erf(x * 0.7071067811865475))


# --------------------------------------------------------------------------
# Kernel 1: fused per-query heads (classifier MLP + softmax, locator MLP).
# Row-tiled over N = B*Q; weights stay VMEM-resident (constant block index).
# --------------------------------------------------------------------------
def _heads_kernel(q_ref, logit_ref,
                  cw1_ref, cb1_ref, cw2_ref, cb2_ref,
                  lw1_ref, lb1_ref, lw2_ref, lb2_ref,
                  prob_ref, loc_ref):
    q = q_ref[...]                                     # (R, H) bf16

    # ---- classifier: Linear -> GELU -> Linear (+logits) -> softmax --------
    h1 = jnp.dot(q, cw1_ref[...], preferred_element_type=jnp.float32) + cb1_ref[...]
    h1 = _gelu(h1).astype(jnp.bfloat16)                # stays in vregs/VMEM
    s = (jnp.dot(h1, cw2_ref[...], preferred_element_type=jnp.float32)
         + cb2_ref[...] + logit_ref[...])              # padded cols carry -1e30 bias
    m = jnp.max(s, axis=-1, keepdims=True)
    e = jnp.exp(s - m)
    denom = jnp.sum(e, axis=-1, keepdims=True)
    prob_ref[...] = e * pl.reciprocal(denom, approx=True)

    # ---- locator: Linear -> GELU -> Linear (raw 6 outputs, lane-padded) ---
    g1 = jnp.dot(q, lw1_ref[...], preferred_element_type=jnp.float32) + lb1_ref[...]
    g1 = _gelu(g1).astype(jnp.bfloat16)
    loc_ref[...] = (jnp.dot(g1, lw2_ref[...], preferred_element_type=jnp.float32)
                    + lb2_ref[...])


# --------------------------------------------------------------------------
# Kernel 2: fused trans_queries / trans_context projections + masked score.
# grid = (B, S_tiles).  q-projection is computed once per batch into VMEM
# scratch at s==0; each context tile is projected and dotted immediately, so
# neither queries_h nor context_h ever touches HBM.
# --------------------------------------------------------------------------
def _score_kernel(q_ref, h_ref, m_ref,
                  tqw0_ref, tqb0_ref, tqw1_ref, tqb1_ref,
                  tcw0_ref, tcb0_ref, tcw1_ref, tcb1_ref,
                  o_ref, qh0_sc, qh1_sc, *, inv_factor):
    @pl.when(pl.program_id(1) == 0)
    def _():
        q = q_ref[...]                                 # (Q, H) bf16
        qh0_sc[...] = (jnp.dot(q, tqw0_ref[...], preferred_element_type=jnp.float32)
                       + tqb0_ref[...]).astype(jnp.bfloat16)
        qh1_sc[...] = (jnp.dot(q, tqw1_ref[...], preferred_element_type=jnp.float32)
                       + tqb1_ref[...]).astype(jnp.bfloat16)

    h = h_ref[...]                                     # (TS, H) bf16
    ch0 = (jnp.dot(h, tcw0_ref[...], preferred_element_type=jnp.float32)
           + tcb0_ref[...]).astype(jnp.bfloat16)
    ch1 = (jnp.dot(h, tcw1_ref[...], preferred_element_type=jnp.float32)
           + tcb1_ref[...]).astype(jnp.bfloat16)

    dn = (((1,), (1,)), ((), ()))                      # contract H with H (A @ B^T)
    s0 = jax.lax.dot_general(qh0_sc[...], ch0, dn,
                             preferred_element_type=jnp.float32) * inv_factor
    s1 = jax.lax.dot_general(qh1_sc[...], ch1, dn,
                             preferred_element_type=jnp.float32) * inv_factor

    valid = m_ref[...] > 0.0                           # (1, TS), broadcasts over Q
    o_ref[0] = jnp.where(valid, s0, NEG_FILL)
    o_ref[1] = jnp.where(valid, s1, NEG_FILL)


# --------------------------------------------------------------------------
# Parameter init (deterministic, mimics nn.Linear uniform(-1/sqrt(fan_in), ..))
# weights are stored as [in, out] (transposed wrt. PyTorch's [out, in]).
# --------------------------------------------------------------------------
def init_params(key, hidden_size, types_num):
    labels_num = types_num + 1  # additional_none=True
    coord = 2

    def lin(key, fan_in, fan_out):
        kw, kb = jax.random.split(key)
        bound = 1.0 / math.sqrt(fan_in)
        w = jax.random.uniform(kw, (fan_in, fan_out), jnp.float32, -bound, bound)
        b = jax.random.uniform(kb, (1, fan_out), jnp.float32, -bound, bound)
        return w, b

    keys = jax.random.split(key, 6)
    p = {}
    p["cls_w1"], p["cls_b1"] = lin(keys[0], hidden_size, hidden_size // 2)
    p["cls_w2"], p["cls_b2"] = lin(keys[1], hidden_size // 2, labels_num)
    p["tq_w"], p["tq_b"] = lin(keys[2], hidden_size, 2 * hidden_size)
    p["tc_w"], p["tc_b"] = lin(keys[3], hidden_size, 2 * hidden_size)
    p["loc_w1"], p["loc_b1"] = lin(keys[4], hidden_size, hidden_size // 2)
    p["loc_w2"], p["loc_b2"] = lin(keys[5], hidden_size // 2, coord * (coord + 1))
    return p


# --------------------------------------------------------------------------
# Predictor forward
# --------------------------------------------------------------------------
def predictor_forward(params, batch_hiddens, batch_masks, queries, queries_locs,
                      queries_logits):
    B, S, H = batch_hiddens.shape
    _, Q, _ = queries.shape
    L = queries_logits.shape[-1]
    H2 = params["cls_w1"].shape[1]
    inv_factor = 1.0 / math.sqrt(H)
    bf16 = jnp.bfloat16

    # ================= fused per-query heads (classifier + locator) =========
    N = B * Q
    N_pad = _ceil_to(N, SUBLANE)
    R = min(N_pad, 256)                     # row tile (generalises to big B*Q)
    LP = _ceil_to(L, LANE)                  # lane-dense label width
    CP = _ceil_to(6, LANE)                  # lane-dense locator width

    q2p = jnp.pad(queries.reshape(N, H), ((0, N_pad - N), (0, 0))).astype(bf16)
    logits_p = jnp.pad(queries_logits.reshape(N, L),
                       ((0, N_pad - N), (0, LP - L)))
    cls_w2p = jnp.pad(params["cls_w2"], ((0, 0), (0, LP - L))).astype(bf16)
    cls_b2p = jnp.pad(params["cls_b2"], ((0, 0), (0, LP - L)),
                      constant_values=PAD_BIAS)        # padded labels -> prob 0
    loc_w2p = jnp.pad(params["loc_w2"], ((0, 0), (0, CP - 6))).astype(bf16)
    loc_b2p = jnp.pad(params["loc_b2"], ((0, 0), (0, CP - 6)))

    probs_p, loc_p = pl.pallas_call(
        _heads_kernel,
        out_shape=(jax.ShapeDtypeStruct((N_pad, LP), jnp.float32),
                   jax.ShapeDtypeStruct((N_pad, CP), jnp.float32)),
        grid=(pl.cdiv(N_pad, R),),
        in_specs=[
            pl.BlockSpec((R, H), lambda i: (i, 0)),
            pl.BlockSpec((R, LP), lambda i: (i, 0)),
            pl.BlockSpec((H, H2), lambda i: (0, 0)),
            pl.BlockSpec((1, H2), lambda i: (0, 0)),
            pl.BlockSpec((H2, LP), lambda i: (0, 0)),
            pl.BlockSpec((1, LP), lambda i: (0, 0)),
            pl.BlockSpec((H, H2), lambda i: (0, 0)),
            pl.BlockSpec((1, H2), lambda i: (0, 0)),
            pl.BlockSpec((H2, CP), lambda i: (0, 0)),
            pl.BlockSpec((1, CP), lambda i: (0, 0)),
        ],
        out_specs=(pl.BlockSpec((R, LP), lambda i: (i, 0)),
                   pl.BlockSpec((R, CP), lambda i: (i, 0))),
        compiler_params=pltpu.CompilerParams(dimension_semantics=("parallel",)),
    )(q2p, logits_p,
      params["cls_w1"].astype(bf16), params["cls_b1"], cls_w2p, cls_b2p,
      params["loc_w1"].astype(bf16), params["loc_b1"], loc_w2p, loc_b2p)

    labels_pros = probs_p[:N, :L].reshape(B, Q, L)
    loc6 = loc_p[:N, :6].reshape(B, Q, 6)
    offsets = loc6[..., :2]
    f = loc6[..., 2:].reshape(B, Q, 2, 2)
    factors = jnp.einsum("bqij,bqkj->bqik", f, f)   # tiny 2x2 epilogue (XLA glue)
    centers = queries_locs + offsets

    # ================ fused trans_q/trans_c projections + masked score ======
    S_pad = _ceil_to(S, LANE)               # lane-dense score last dim
    TS = min(S_pad, 512)                    # context row tile
    h_p = jnp.pad(batch_hiddens, ((0, 0), (0, S_pad - S), (0, 0))).astype(bf16)
    mask_f = jnp.pad(batch_masks.astype(jnp.float32),
                     ((0, 0), (0, S_pad - S))).reshape(B, 1, S_pad)
    q_b = queries.astype(bf16)

    def split2(w, b):   # channel c of the Unflatten(-1,[2,H]) = columns [c*H:(c+1)*H]
        return (w[:, :H].astype(bf16), b[:, :H],
                w[:, H:].astype(bf16), b[:, H:])

    tqw0, tqb0, tqw1, tqb1 = split2(params["tq_w"], params["tq_b"])
    tcw0, tcb0, tcw1, tcb1 = split2(params["tc_w"], params["tc_b"])

    score_p = pl.pallas_call(
        functools.partial(_score_kernel, inv_factor=inv_factor),
        out_shape=jax.ShapeDtypeStruct((B, 2, Q, S_pad), jnp.float32),
        grid=(B, pl.cdiv(S_pad, TS)),
        in_specs=[
            pl.BlockSpec((None, Q, H), lambda b, s: (b, 0, 0)),
            pl.BlockSpec((None, TS, H), lambda b, s: (b, s, 0)),
            pl.BlockSpec((None, 1, TS), lambda b, s: (b, 0, s)),
            pl.BlockSpec((H, H), lambda b, s: (0, 0)),
            pl.BlockSpec((1, H), lambda b, s: (0, 0)),
            pl.BlockSpec((H, H), lambda b, s: (0, 0)),
            pl.BlockSpec((1, H), lambda b, s: (0, 0)),
            pl.BlockSpec((H, H), lambda b, s: (0, 0)),
            pl.BlockSpec((1, H), lambda b, s: (0, 0)),
            pl.BlockSpec((H, H), lambda b, s: (0, 0)),
            pl.BlockSpec((1, H), lambda b, s: (0, 0)),
        ],
        out_specs=pl.BlockSpec((None, 2, Q, TS), lambda b, s: (b, 0, 0, s)),
        scratch_shapes=[pltpu.VMEM((Q, H), jnp.bfloat16),
                        pltpu.VMEM((Q, H), jnp.bfloat16)],
        compiler_params=pltpu.CompilerParams(
            dimension_semantics=("parallel", "arbitrary")),
    )(q_b, h_p, mask_f,
      tqw0, tqb0, tqw1, tqb1, tcw0, tcb0, tcw1, tcb1)

    score = score_p[..., :S]                # [B, 2, Q, S], masked with -1e8

    # TODO(synk): functional.get_table / functional.distribute /
    # functional.weight_softmax come from an external module that is not
    # provided; the span-pair table and location-weighted softmax (locs_pros)
    # are therefore not reproduced here.
    return labels_pros, score, centers, factors


# --------------------------------------------------------------------------
if __name__ == "__main__":
    B, S, Q, H, T = 2, 16, 8, 32, 4  # batch, sentence_len, queries, hidden, types

    key = jax.random.PRNGKey(0)
    kp, k1, k2, k3, k4 = jax.random.split(key, 5)

    params = init_params(kp, H, T)

    batch_hiddens = jax.random.normal(k1, (B, S, H), jnp.float32)
    lengths = jnp.array([S, S - 4], dtype=jnp.int32)
    batch_masks = jnp.arange(S)[None, :] < lengths[:, None]      # [B, S] bool
    queries = jax.random.normal(k2, (B, Q, H), jnp.float32)
    queries_locs = jax.random.normal(k3, (B, Q, 2), jnp.float32)
    queries_logits = jax.random.normal(k4, (B, Q, T + 1), jnp.float32)

    labels_pros, score, centers, factors = predictor_forward(
        params, batch_hiddens, batch_masks, queries, queries_locs, queries_logits
    )
    jax.block_until_ready((labels_pros, score, centers, factors))

    assert labels_pros.shape == (B, Q, T + 1)
    assert score.shape == (B, 2, Q, S)
    assert centers.shape == (B, Q, 2)
    assert factors.shape == (B, Q, 2, 2)
    assert bool(jnp.all(jnp.isfinite(labels_pros)))
    assert bool(jnp.all(jnp.isfinite(score)))
    print("KERNEL_OK")
</pallas_src>

<mosaic_0001>
module attributes {stable_mosaic.version = 11 : i64} {
  func.func @_heads_kernel(%arg0: i32, %arg1: memref<16x32xbf16, #tpu.memory_space<vmem>>, %arg2: memref<16x128xf32, #tpu.memory_space<vmem>>, %arg3: memref<32x16xbf16, #tpu.memory_space<vmem>>, %arg4: memref<1x16xf32, #tpu.memory_space<vmem>>, %arg5: memref<16x128xbf16, #tpu.memory_space<vmem>>, %arg6: memref<1x128xf32, #tpu.memory_space<vmem>>, %arg7: memref<32x16xbf16, #tpu.memory_space<vmem>>, %arg8: memref<1x16xf32, #tpu.memory_space<vmem>>, %arg9: memref<16x128xbf16, #tpu.memory_space<vmem>>, %arg10: memref<1x128xf32, #tpu.memory_space<vmem>>, %arg11: memref<16x128xf32, #tpu.memory_space<vmem>>, %arg12: memref<16x128xf32, #tpu.memory_space<vmem>>) attributes {dimension_semantics = [#tpu.dimension_semantics<parallel>], iteration_bounds = array<i64: 1>, scalar_prefetch = 0 : i64, scratch_operands = 0 : i64, tpu.core_type = #tpu.core_type<tc>, window_params = [{transform_indices = @transform_0, window_bounds = array<i64: 16, 32>}, {transform_indices = @transform_1, window_bounds = array<i64: 16, 128>}, {pipeline_mode = #tpu.pipeline_mode<synchronous>, transform_indices = @transform_2, window_bounds = array<i64: 32, 16>}, {pipeline_mode = #tpu.pipeline_mode<synchronous>, transform_indices = @transform_3, window_bounds = array<i64: 1, 16>}, {pipeline_mode = #tpu.pipeline_mode<synchronous>, transform_indices = @transform_4, window_bounds = array<i64: 16, 128>}, {pipeline_mode = #tpu.pipeline_mode<synchronous>, transform_indices = @transform_5, window_bounds = array<i64: 1, 128>}, {pipeline_mode = #tpu.pipeline_mode<synchronous>, transform_indices = @transform_6, window_bounds = array<i64: 32, 16>}, {pipeline_mode = #tpu.pipeline_mode<synchronous>, transform_indices = @transform_7, window_bounds = array<i64: 1, 16>}, {pipeline_mode = #tpu.pipeline_mode<synchronous>, transform_indices = @transform_8, window_bounds = array<i64: 16, 128>}, {pipeline_mode = #tpu.pipeline_mode<synchronous>, transform_indices = @transform_9, window_bounds = array<i64: 1, 128>}, {transform_indices = @transform_10, window_bounds = array<i64: 16, 128>}, {transform_indices = @transform_11, window_bounds = array<i64: 16, 128>}]} {
    %c0 = arith.constant 0 : index
    %c0_0 = arith.constant 0 : index
    %0 = vector.load %arg1[%c0, %c0_0] : memref<16x32xbf16, #tpu.memory_space<vmem>>, vector<16x32xbf16>
    %c0_1 = arith.constant 0 : index
    %c0_2 = arith.constant 0 : index
    %1 = vector.load %arg3[%c0_1, %c0_2] : memref<32x16xbf16, #tpu.memory_space<vmem>>, vector<32x16xbf16>
    %cst = arith.constant dense<0.000000e+00> : vector<16x16xf32>
    %2 = tpu.matmul %0, %1, %cst {dimension_numbers = #tpu.dot_dimension_numbers<[1], [0], [0], [1], [0, 0, 1, 1], [], []>} : vector<16x32xbf16>, vector<32x16xbf16>, vector<16x16xf32> -> vector<16x16xf32>
    %c0_3 = arith.constant 0 : index
    %c0_4 = arith.constant 0 : index
    %3 = vector.load %arg4[%c0_3, %c0_4] : memref<1x16xf32, #tpu.memory_space<vmem>>, vector<1x16xf32>
    %4 = vector.broadcast %3 : vector<1x16xf32> to vector<16x16xf32>
    %5 = arith.addf %2, %4 : vector<16x16xf32>
    %cst_5 = arith.constant 5.000000e-01 : f32
    %6 = vector.broadcast %cst_5 : f32 to vector<16x16xf32>
    %7 = arith.mulf %6, %5 : vector<16x16xf32>
    %cst_6 = arith.constant 0.707106769 : f32
    %8 = vector.broadcast %cst_6 : f32 to vector<16x16xf32>
    %9 = arith.mulf %5, %8 : vector<16x16xf32>
    %10 = math.absf %9 : vector<16x16xf32>
    %cst_7 = arith.constant 0.327591091 : f32
    %11 = vector.broadcast %cst_7 : f32 to vector<16x16xf32>
    %12 = arith.mulf %11, %10 : vector<16x16xf32>
    %cst_8 = arith.constant 1.000000e+00 : f32
    %13 = vector.broadcast %cst_8 : f32 to vector<16x16xf32>
    %14 = arith.addf %13, %12 : vector<16x16xf32>
    %cst_9 = arith.constant 1.000000e+00 : f32
    %15 = vector.broadcast %cst_9 : f32 to vector<16x16xf32>
    %16 = arith.divf %15, %14 : vector<16x16xf32>
    %cst_10 = arith.constant 1.06140542 : f32
    %17 = vector.broadcast %cst_10 : f32 to vector<16x16xf32>
    %18 = arith.mulf %17, %16 : vector<16x16xf32>
    %cst_11 = arith.constant -1.45315206 : f32
    %19 = vector.broadcast %cst_11 : f32 to vector<16x16xf32>
    %20 = arith.addf %18, %19 : vector<16x16xf32>
    %21 = arith.mulf %20, %16 : vector<16x16xf32>
    %cst_12 = arith.constant 1.42141378 : f32
    %22 = vector.broadcast %cst_12 : f32 to vector<16x16xf32>
    %23 = arith.addf %21, %22 : vector<16x16xf32>
    %24 = arith.mulf %23, %16 : vector<16x16xf32>
    %cst_13 = arith.constant -0.284496725 : f32
    %25 = vector.broadcast %cst_13 : f32 to vector<16x16xf32>
    %26 = arith.addf %24, %25 : vector<16x16xf32>
    %27 = arith.mulf %26, %16 : vector<16x16xf32>
    %cst_14 = arith.constant 0.254829586 : f32
    %28 = vector.broadcast %cst_14 : f32 to vector<16x16xf32>
    %29 = arith.addf %27, %28 : vector<16x16xf32>
    %30 = arith.mulf %29, %16 : vector<16x16xf32>
    %cst_15 = arith.constant 0.000000e+00 : f32
    %31 = vector.broadcast %cst_15 : f32 to vector<16x16xf32>
    %32 = arith.subf %31, %10 : vector<16x16xf32>
    %33 = arith.mulf %32, %10 : vector<16x16xf32>
    %34 = math.exp %33 : vector<16x16xf32>
    %35 = arith.mulf %30, %34 : vector<16x16xf32>
    %cst_16 = arith.constant 1.000000e+00 : f32
    %36 = vector.broadcast %cst_16 : f32 to vector<16x16xf32>
    %37 = arith.subf %36, %35 : vector<16x16xf32>
    %cst_17 = arith.constant 0.000000e+00 : f32
    %38 = vector.broadcast %cst_17 : f32 to vector<16x16xf32>
    %39 = arith.cmpf oge, %9, %38 : vector<16x16xf32>
    %cst_18 = arith.constant 0.000000e+00 : f32
    %40 = vector.broadcast %cst_18 : f32 to vector<16x16xf32>
    %41 = arith.subf %40, %37 : vector<16x16xf32>
    %42 = arith.select %39, %37, %41 : vector<16x16xi1>, vector<16x16xf32>
    %cst_19 = arith.constant 1.000000e+00 : f32
    %43 = vector.broadcast %cst_19 : f32 to vector<16x16xf32>
    %44 = arith.addf %43, %42 : vector<16x16xf32>
    %45 = arith.mulf %7, %44 : vector<16x16xf32>
    %46 = arith.truncf %45 : vector<16x16xf32> to vector<16x16xbf16>
    %c0_20 = arith.constant 0 : index
    %c0_21 = arith.constant 0 : index
    %47 = vector.load %arg5[%c0_20, %c0_21] : memref<16x128xbf16, #tpu.memory_space<vmem>>, vector<16x128xbf16>
    %cst_22 = arith.constant dense<0.000000e+00> : vector<16x128xf32>
    %48 = tpu.matmul %46, %47, %cst_22 {dimension_numbers = #tpu.dot_dimension_numbers<[1], [0], [0], [1], [0, 0, 1, 1], [], []>} : vector<16x16xbf16>, vector<16x128xbf16>, vector<16x128xf32> -> vector<16x128xf32>
    %c0_23 = arith.constant 0 : index
    %c0_24 = arith.constant 0 : index
    %49 = vector.load %arg6[%c0_23, %c0_24] : memref<1x128xf32, #tpu.memory_space<vmem>>, vector<1x128xf32>
    %50 = vector.broadcast %49 : vector<1x128xf32> to vector<16x128xf32>
    %51 = arith.addf %48, %50 : vector<16x128xf32>
    %c0_25 = arith.constant 0 : index
    %c0_26 = arith.constant 0 : index
    %52 = vector.load %arg2[%c0_25, %c0_26] : memref<16x128xf32, #tpu.memory_space<vmem>>, vector<16x128xf32>
    %53 = arith.addf %51, %52 : vector<16x128xf32>
    %cst_27 = arith.constant dense<0xFF800000> : vector<16xf32>
    %54 = vector.multi_reduction <maximumf>, %53, %cst_27 [1] : vector<16x128xf32> to vector<16xf32>
    %55 = vector.shape_cast %54 : vector<16xf32> to vector<16x1xf32>
    %56 = vector.broadcast %55 : vector<16x1xf32> to vector<16x128xf32>
    %57 = arith.subf %53, %56 : vector<16x128xf32>
    %58 = math.exp %57 : vector<16x128xf32>
    %cst_28 = arith.constant dense<0.000000e+00> : vector<16xf32>
    %59 = vector.multi_reduction <add>, %58, %cst_28 [1] : vector<16x128xf32> to vector<16xf32>
    %60 = vector.shape_cast %59 : vector<16xf32> to vector<16x1xf32>
    %61 = tpu.reciprocal %60 {approx = true} : vector<16x1xf32> -> vector<16x1xf32>
    %62 = vector.broadcast %61 : vector<16x1xf32> to vector<16x128xf32>
    %63 = arith.mulf %58, %62 : vector<16x128xf32>
    %c0_29 = arith.constant 0 : index
    %c0_30 = arith.constant 0 : index
    %64 = vector.load %arg11[%c0_29, %c0_30] : memref<16x128xf32, #tpu.memory_space<vmem>>, vector<16x128xf32>
    tpu.vector_store %arg11[%c0_29, %c0_30], %63 {strides = array<i32>} : memref<16x128xf32, #tpu.memory_space<vmem>>, vector<16x128xf32>,
    %c0_31 = arith.constant 0 : index
    %c0_32 = arith.constant 0 : index
    %65 = vector.load %arg7[%c0_31, %c0_32] : memref<32x16xbf16, #tpu.memory_space<vmem>>, vector<32x16xbf16>
    %cst_33 = arith.constant dense<0.000000e+00> : vector<16x16xf32>
    %66 = tpu.matmul %0, %65, %cst_33 {dimension_numbers = #tpu.dot_dimension_numbers<[1], [0], [0], [1], [0, 0, 1, 1], [], []>} : vector<16x32xbf16>, vector<32x16xbf16>, vector<16x16xf32> -> vector<16x16xf32>
    %c0_34 = arith.constant 0 : index
    %c0_35 = arith.constant 0 : index
    %67 = vector.load %arg8[%c0_34, %c0_35] : memref<1x16xf32, #tpu.memory_space<vmem>>, vector<1x16xf32>
    %68 = vector.broadcast %67 : vector<1x16xf32> to vector<16x16xf32>
    %69 = arith.addf %66, %68 : vector<16x16xf32>
    %cst_36 = arith.constant 5.000000e-01 : f32
    %70 = vector.broadcast %cst_36 : f32 to vector<16x16xf32>
    %71 = arith.mulf %70, %69 : vector<16x16xf32>
    %cst_37 = arith.constant 0.707106769 : f32
    %72 = vector.broadcast %cst_37 : f32 to vector<16x16xf32>
    %73 = arith.mulf %69, %72 : vector<16x16xf32>
    %74 = math.absf %73 : vector<16x16xf32>
    %cst_38 = arith.constant 0.327591091 : f32
    %75 = vector.broadcast %cst_38 : f32 to vector<16x16xf32>
    %76 = arith.mulf %75, %74 : vector<16x16xf32>
    %cst_39 = arith.constant 1.000000e+00 : f32
    %77 = vector.broadcast %cst_39 : f32 to vector<16x16xf32>
    %78 = arith.addf %77, %76 : vector<16x16xf32>
    %cst_40 = arith.constant 1.000000e+00 : f32
    %79 = vector.broadcast %cst_40 : f32 to vector<16x16xf32>
    %80 = arith.divf %79, %78 : vector<16x16xf32>
    %cst_41 = arith.constant 1.06140542 : f32
    %81 = vector.broadcast %cst_41 : f32 to vector<16x16xf32>
    %82 = arith.mulf %81, %80 : vector<16x16xf32>
    %cst_42 = arith.constant -1.45315206 : f32
    %83 = vector.broadcast %cst_42 : f32 to vector<16x16xf32>
    %84 = arith.addf %82, %83 : vector<16x16xf32>
    %85 = arith.mulf %84, %80 : vector<16x16xf32>
    %cst_43 = arith.constant 1.42141378 : f32
    %86 = vector.broadcast %cst_43 : f32 to vector<16x16xf32>
    %87 = arith.addf %85, %86 : vector<16x16xf32>
    %88 = arith.mulf %87, %80 : vector<16x16xf32>
    %cst_44 = arith.constant -0.284496725 : f32
    %89 = vector.broadcast %cst_44 : f32 to vector<16x16xf32>
    %90 = arith.addf %88, %89 : vector<16x16xf32>
    %91 = arith.mulf %90, %80 : vector<16x16xf32>
    %cst_45 = arith.constant 0.254829586 : f32
    %92 = vector.broadcast %cst_45 : f32 to vector<16x16xf32>
    %93 = arith.addf %91, %92 : vector<16x16xf32>
    %94 = arith.mulf %93, %80 : vector<16x16xf32>
    %cst_46 = arith.constant 0.000000e+00 : f32
    %95 = vector.broadcast %cst_46 : f32 to vector<16x16xf32>
    %96 = arith.subf %95, %74 : vector<16x16xf32>
    %97 = arith.mulf %96, %74 : vector<16x16xf32>
    %98 = math.exp %97 : vector<16x16xf32>
    %99 = arith.mulf %94, %98 : vector<16x16xf32>
    %cst_47 = arith.constant 1.000000e+00 : f32
    %100 = vector.broadcast %cst_47 : f32 to vector<16x16xf32>
    %101 = arith.subf %100, %99 : vector<16x16xf32>
    %cst_48 = arith.constant 0.000000e+00 : f32
    %102 = vector.broadcast %cst_48 : f32 to vector<16x16xf32>
    %103 = arith.cmpf oge, %73, %102 : vector<16x16xf32>
    %cst_49 = arith.constant 0.000000e+00 : f32
    %104 = vector.broadcast %cst_49 : f32 to vector<16x16xf32>
    %105 = arith.subf %104, %101 : vector<16x16xf32>
    %106 = arith.select %103, %101, %105 : vector<16x16xi1>, vector<16x16xf32>
    %cst_50 = arith.constant 1.000000e+00 : f32
    %107 = vector.broadcast %cst_50 : f32 to vector<16x16xf32>
    %108 = arith.addf %107, %106 : vector<16x16xf32>
    %109 = arith.mulf %71, %108 : vector<16x16xf32>
    %110 = arith.truncf %109 : vector<16x16xf32> to vector<16x16xbf16>
    %c0_51 = arith.constant 0 : index
    %c0_52 = arith.constant 0 : index
    %111 = vector.load %arg9[%c0_51, %c0_52] : memref<16x128xbf16, #tpu.memory_space<vmem>>, vector<16x128xbf16>
    %cst_53 = arith.constant dense<0.000000e+00> : vector<16x128xf32>
    %112 = tpu.matmul %110, %111, %cst_53 {dimension_numbers = #tpu.dot_dimension_numbers<[1], [0], [0], [1], [0, 0, 1, 1], [], []>} : vector<16x16xbf16>, vector<16x128xbf16>, vector<16x128xf32> -> vector<16x128xf32>
    %c0_54 = arith.constant 0 : index
    %c0_55 = arith.constant 0 : index
    %113 = vector.load %arg10[%c0_54, %c0_55] : memref<1x128xf32, #tpu.memory_space<vmem>>, vector<1x128xf32>
    %114 = vector.broadcast %113 : vector<1x128xf32> to vector<16x128xf32>
    %115 = arith.addf %112, %114 : vector<16x128xf32>
    %c0_56 = arith.constant 0 : index
    %c0_57 = arith.constant 0 : index
    %116 = vector.load %arg12[%c0_56, %c0_57] : memref<16x128xf32, #tpu.memory_space<vmem>>, vector<16x128xf32>
    tpu.vector_store %arg12[%c0_56, %c0_57], %115 {strides = array<i32>} : memref<16x128xf32, #tpu.memory_space<vmem>>, vector<16x128xf32>,
    return
  }
  func.func @transform_0(%arg0: i32) -> (i32, i32) {
    %c0_i32 = arith.constant 0 : i32
    %c0_i32_0 = arith.constant 0 : i32
    return %arg0, %c0_i32 : i32, i32
  }
  func.func @transform_1(%arg0: i32) -> (i32, i32) {
    %c0_i32 = arith.constant 0 : i32
    %c0_i32_0 = arith.constant 0 : i32
    return %arg0, %c0_i32 : i32, i32
  }
  func.func @transform_2(%arg0: i32) -> (i32, i32) {
    %c0_i32 = arith.constant 0 : i32
    %c0_i32_0 = arith.constant 0 : i32
    %c0_i32_1 = arith.constant 0 : i32
    return %c0_i32, %c0_i32_0 : i32, i32
  }
  func.func @transform_3(%arg0: i32) -> (i32, i32) {
    %c0_i32 = arith.constant 0 : i32
    %c0_i32_0 = arith.constant 0 : i32
    %c0_i32_1 = arith.constant 0 : i32
    return %c0_i32, %c0_i32_0 : i32, i32
  }
  func.func @transform_4(%arg0: i32) -> (i32, i32) {
    %c0_i32 = arith.constant 0 : i32
    %c0_i32_0 = arith.constant 0 : i32
    %c0_i32_1 = arith.constant 0 : i32
    return %c0_i32, %c0_i32_0 : i32, i32
  }
  func.func @transform_5(%arg0: i32) -> (i32, i32) {
    %c0_i32 = arith.constant 0 : i32
    %c0_i32_0 = arith.constant 0 : i32
    %c0_i32_1 = arith.constant 0 : i32
    return %c0_i32, %c0_i32_0 : i32, i32
  }
  func.func @transform_6(%arg0: i32) -> (i32, i32) {
    %c0_i32 = arith.constant 0 : i32
    %c0_i32_0 = arith.constant 0 : i32
    %c0_i32_1 = arith.constant 0 : i32
    return %c0_i32, %c0_i32_0 : i32, i32
  }
  func.func @transform_7(%arg0: i32) -> (i32, i32) {
    %c0_i32 = arith.constant 0 : i32
    %c0_i32_0 = arith.constant 0 : i32
    %c0_i32_1 = arith.constant 0 : i32
    return %c0_i32, %c0_i32_0 : i32, i32
  }
  func.func @transform_8(%arg0: i32) -> (i32, i32) {
    %c0_i32 = arith.constant 0 : i32
    %c0_i32_0 = arith.constant 0 : i32
    %c0_i32_1 = arith.constant 0 : i32
    return %c0_i32, %c0_i32_0 : i32, i32
  }
  func.func @transform_9(%arg0: i32) -> (i32, i32) {
    %c0_i32 = arith.constant 0 : i32
    %c0_i32_0 = arith.constant 0 : i32
    %c0_i32_1 = arith.constant 0 : i32
    return %c0_i32, %c0_i32_0 : i32, i32
  }
  func.func @transform_10(%arg0: i32) -> (i32, i32) {
    %c0_i32 = arith.constant 0 : i32
    %c0_i32_0 = arith.constant 0 : i32
    return %arg0, %c0_i32 : i32, i32
  }
  func.func @transform_11(%arg0: i32) -> (i32, i32) {
    %c0_i32 = arith.constant 0 : i32
    %c0_i32_0 = arith.constant 0 : i32
    return %arg0, %c0_i32 : i32, i32
  }
}

</mosaic_0001>

<llo_original>
// kernel: tpu_custom_call.1
$region0: #{tpu_custom_call.1}
  #allocation0 [shape = 'u32[]', space=smem, size = 0x4, offset = 0x4, fixed_abs, tag = 'smem constant byte address 0x4 - core index']
  #allocation1 [shape = 'u32[144,128]{1,0:T(1,128)}', space=vmem, size = 0x12000, scoped, tag = 'internal scratch']
  %s0 = inlined_call_operand.vmem [shape: bf16[16,32], index: 0, kind: input, shape index: {}]
  %s1 = inlined_call_operand.vmem [shape: f32[16,128], index: 1, kind: input, shape index: {}]
  %s2 = inlined_call_operand.vmem [shape: bf16[32,16], index: 2, kind: input, shape index: {}]
  %s3 = inlined_call_operand.vmem [shape: f32[1,16], index: 3, kind: input, shape index: {}]
  %s4 = inlined_call_operand.vmem [shape: bf16[16,128], index: 4, kind: input, shape index: {}]
  %s5 = inlined_call_operand.vmem [shape: f32[1,128], index: 5, kind: input, shape index: {}]
  %s6 = inlined_call_operand.vmem [shape: bf16[32,16], index: 6, kind: input, shape index: {}]
  %s7 = inlined_call_operand.vmem [shape: f32[1,16], index: 7, kind: input, shape index: {}]
  %s8 = inlined_call_operand.vmem [shape: bf16[16,128], index: 8, kind: input, shape index: {}]
  %s9 = inlined_call_operand.vmem [shape: f32[1,128], index: 9, kind: input, shape index: {}]
  %s10 = inlined_call_operand.hbm [shape: f32[16,128], index: 10, kind: output, shape index: {0}]
  %s11 = inlined_call_operand.hbm [shape: f32[16,128], index: 11, kind: output, shape index: {1}]
  %12 = xla_tuple %s10, %s11
  %s13 = sld [smem:[#allocation0]]
  $region58: #{tpu_custom_call.1} parent=0
    _
  %s15 = ssub.s32 1, %s13
  %s16 = scalar_select 0, %s15, %s13
  $region1: #{tpu_custom_call.1} parent=0
    #allocation2 [shape = 'u8[8192]{0}', space=vmem, size = 0x2000, scoped, tag = 'output window, operand 0, single buffered']
    #allocation3 [shape = 's32[1]{0}', space=sflag, size = 0x4, scoped, tag = 'scoped memory for tpu_custom_call.1']
    #allocation4 [shape = 'u8[8192]{0}', space=vmem, size = 0x2000, scoped, tag = 'output window, operand 1, single buffered']
    #allocation5 [shape = 's32[1]{0}', space=sflag, size = 0x4, scoped, tag = 'scoped memory for tpu_custom_call.1']
    %17 = vsyncpa [#allocation3], 0
    %18 = vsyncpa [#allocation5], 0
    // Predicated region
    $region2: #{tpu_custom_call.1} parent=1 // pred_check
      _
    $region3: #{tpu_custom_call.1} parent=1 // pred_check_branch
      %20 = sbr.rel (0) target = $region5
    $region4: #{tpu_custom_call.1} parent=1 // pred_region
      _
    $region5: #{tpu_custom_call.1} parent=1 // pred_fallthru
      _
    // Predicated region
    $region6: #{tpu_custom_call.1} parent=1 // pred_check
      _
    $region7: #{tpu_custom_call.1} parent=1 // pred_check_branch
      %22 = sbr.rel (0) target = $region9
    $region8: #{tpu_custom_call.1} parent=1 // pred_region
      _
    $region9: #{tpu_custom_call.1} parent=1 // pred_fallthru
      _
    // Predicated region
    $region10: #{tpu_custom_call.1} parent=1 // pred_check
      _
    $region11: #{tpu_custom_call.1} parent=1 // pred_check_branch
      %24 = sbr.rel (0) target = $region13
    $region12: #{tpu_custom_call.1} parent=1 // pred_region
      _
    $region13: #{tpu_custom_call.1} parent=1 // pred_fallthru
      _
    // Predicated region
    $region14: #{tpu_custom_call.1} parent=1 // pred_check
      _
    $region15: #{tpu_custom_call.1} parent=1 // pred_check_branch
      %26 = sbr.rel (0) target = $region17
    $region16: #{tpu_custom_call.1} parent=1 // pred_region
      _
    $region17: #{tpu_custom_call.1} parent=1 // pred_fallthru
      _
    // Predicated region
    $region18: #{tpu_custom_call.1} parent=1 // pred_check
      _
    $region19: #{tpu_custom_call.1} parent=1 // pred_check_branch
      %28 = sbr.rel (0) target = $region21
    $region20: #{tpu_custom_call.1} parent=1 // pred_region
      _
    $region21: #{tpu_custom_call.1} parent=1 // pred_fallthru
      _
    // Predicated region
    $region22: #{tpu_custom_call.1} parent=1 // pred_check
      _
    $region23: #{tpu_custom_call.1} parent=1 // pred_check_branch
      %30 = sbr.rel (0) target = $region25
    $region24: #{tpu_custom_call.1} parent=1 // pred_region
      _
    $region25: #{tpu_custom_call.1} parent=1 // pred_fallthru
      _
    // Predicated region
    $region26: #{tpu_custom_call.1} parent=1 // pred_check
      _
    $region27: #{tpu_custom_call.1} parent=1 // pred_check_branch
      %32 = sbr.rel (0) target = $region29
    $region28: #{tpu_custom_call.1} parent=1 // pred_region
      _
    $region29: #{tpu_custom_call.1} parent=1 // pred_fallthru
      _
    // Predicated region
    $region30: #{tpu_custom_call.1} parent=1 // pred_check
      _
    $region31: #{tpu_custom_call.1} parent=1 // pred_check_branch
      %34 = sbr.rel (0) target = $region33
    $region32: #{tpu_custom_call.1} parent=1 // pred_region
      _
    $region33: #{tpu_custom_call.1} parent=1 // pred_fallthru
      _
    // Predicated region
    $region34: #{tpu_custom_call.1} parent=1 // pred_check
      _
    $region35: #{tpu_custom_call.1} parent=1 // pred_check_branch
      %36 = sbr.rel (0) target = $region37
    $region36: #{tpu_custom_call.1} parent=1 // pred_region
      _
    $region37: #{tpu_custom_call.1} parent=1 // pred_fallthru
      _
    // Predicated region
    $region38: #{tpu_custom_call.1} parent=1 // pred_check
      _
    $region39: #{tpu_custom_call.1} parent=1 // pred_check_branch
      %38 = sbr.rel (0) target = $region41
    $region40: #{tpu_custom_call.1} parent=1 // pred_region
      _
    $region41: #{tpu_custom_call.1} parent=1 // pred_fallthru
      _
    %v40 = vld [vmem:[%s0] sm:$0xf]
    %v41 = vld [vmem:[%s0 + $0x4] sm:$0xf]
    %v42 = vld [vmem:[%s2] sm:$0xf]
    %v43 = vld [vmem:[%s2 + $0x4] sm:$0xf]
    %v44 = vld [vmem:[%s2 + $0x8] sm:$0xf]
    %v45 = vld [vmem:[%s2 + $0xc] sm:$0xf]
    %v46 = vld [vmem:[%s3] sm:$0x1]
    %v48 = vlaneseq
    %v49 = vshrl.u32 %v48, 7
    %v50 = vsub.s32 0, %v49
    %v51 = vrot.slane %v46, %v50
    %v55 = vunpack.c.l.b16 %v40
    %v56 = vunpack.c.l.b16 %v41
    %v57 = vpack.c.b16 %v56, %v55
    %v62 = vunpack.c.l.b16 %v42
    %v63 = vunpack.c.l.b16 %v43
    %v64 = vunpack.c.l.b16 %v44
    %v65 = vunpack.c.l.b16 %v45
    %v66 = vpack.c.b16 %v63, %v62
    %v67 = vpack.c.b16 %v65, %v64
    %vm70 = vcmask 261120
    %v72 = vsel %vm70, %v57, 0
    %74 = vmatprep.subr.bf16.mxu0 0
    %75 = vmatpush1.bf16.msra.mxu0 %v66
    %76 = vmatprep.subr.bf16.mxu0 0
    %77 = vmatpush1.bf16.msra.mxu0 %v67
    %78 = vmatprep.subr.bf16.mxu0 0
    %79 = vmatpush1.bf16.msra.mxu0 0
    %80 = vmatprep.subr.bf16.mxu0 0
    %81 = vmatpush1.bf16.msra.mxu0 0
    %82 = vmatprep.subr.bf16.mxu0 0
    %83 = vmatpush1.bf16.msra.mxu0 0
    %84 = vmatprep.subr.bf16.mxu0 0
    %85 = vmatpush1.bf16.msra.mxu0 0
    %86 = vmatprep.subr.bf16.mxu0 0
    %87 = vmatpush1.bf16.msra.mxu0 0
    %88 = vmatprep.subr.bf16.mxu0 0
    %89 = vmatpush1.bf16.msra.mxu0 0
    %90 = vmatprep.subr.bf16.mxu0 0
    %91 = vmatpush1.bf16.msra.mxu0 0
    %92 = vmatprep.subr.bf16.mxu0 0
    %93 = vmatpush1.bf16.msra.mxu0 0
    %94 = vmatprep.subr.bf16.mxu0 0
    %95 = vmatpush1.bf16.msra.mxu0 0
    %96 = vmatprep.subr.bf16.mxu0 0
    %97 = vmatpush1.bf16.msra.mxu0 0
    %98 = vmatprep.subr.bf16.mxu0 0
    %99 = vmatpush1.bf16.msra.mxu0 0
    %100 = vmatprep.subr.bf16.mxu0 0
    %101 = vmatpush1.bf16.msra.mxu0 0
    %102 = vmatprep.subr.bf16.mxu0 0
    %103 = vmatpush1.bf16.msra.mxu0 0
    %104 = vmatprep.subr.bf16.mxu0 0
    %105 = vmatpush1.bf16.msra.mxu0 0
    %106 = vmatprep.mubr.bf16.mxu0 0
    %107 = vmatmul.mubr.bf16.gmra.mrb[0].mxu0 %v72
    %v108 = vpop.f32.mrb[0].mxu0
    %v109 = vadd.f32 %v51, %v108
    %v110 = vpop.f32.mrb[0].mxu0
    %v111 = vpop.f32.mrb[0].mxu0
    %v112 = vadd.f32 %v51, %v111
    %v113 = vpop.f32.mrb[0].mxu0
    %114 = vdwg.mxu0
    %v115 = vmul.f32 %v109, 0.5
    %v116 = vmul.f32 %v112, 0.5
    %v117 = vmul.f32 %v109, 0.70710677
    %v118 = vmul.f32 %v112, 0.70710677
    %v119 = vand.u32 2147483647, %v117
    %v120 = vand.u32 2147483647, %v118
    %v121 = vmul.f32 %v119, 0.3275911
    %v122 = vmul.f32 %v120, 0.3275911
    %v123 = vadd.f32 %v121, 1.0
    %v124 = vadd.f32 %v122, 1.0
    %v125 = vrcp.pop %v123
    %v126 = vmul.f32 1.0, %v125
    %v127 = vrcp.pop %v124
    %v128 = vmul.f32 1.0, %v127
    %v129 = vmul.f32 %v126, 1.0614054
    %v130 = vmul.f32 %v128, 1.0614054
    %v131 = vadd.f32 %v129, -1.4531521
    %v132 = vadd.f32 %v130, -1.4531521
    %v133 = vmul.f32 %v131, %v126
    %v134 = vmul.f32 %v132, %v128
    %v135 = vadd.f32 %v133, 1.4214138
    %v136 = vadd.f32 %v134, 1.4214138
    %v137 = vmul.f32 %v135, %v126
    %v138 = vmul.f32 %v136, %v128
    %v139 = vadd.f32 %v137, -0.28449672
    %v140 = vadd.f32 %v138, -0.28449672
    %v141 = vmul.f32 %v139, %v126
    %v142 = vmul.f32 %v140, %v128
    %v143 = vadd.f32 %v141, 0.2548296
    %v144 = vadd.f32 %v142, 0.2548296
    %v145 = vmul.f32 %v143, %v126
    %v146 = vmul.f32 %v144, %v128
    %v147 = vsub.f32 0.0, %v119
    %v148 = vsub.f32 0.0, %v120
    %v149 = vmul.f32 %v147, %v119
    %v150 = vmul.f32 %v148, %v120
    %v151 = vmul.f32 %v149, 1.442695
    %v152 = vpow.pop %v151
    %v153 = vmul.f32 %v150, 1.442695
    %v154 = vpow.pop %v153
    %v155 = vmul.f32 %v145, %v152
    %v156 = vmul.f32 %v146, %v154
    %v157 = vsub.f32 1.0, %v155
    %v158 = vsub.f32 1.0, %v156
    %vm159 = vcmp.ge.f32.partialorder %v117, 0.0
    %vm160 = vcmp.ge.f32.partialorder %v118, 0.0
    %v161 = vsub.f32 0.0, %v157
    %v162 = vsub.f32 0.0, %v158
    %v163 = vsel %vm159, %v157, %v161
    %v164 = vsel %vm160, %v158, %v162
    %v165 = vadd.f32 %v163, 1.0
    %v166 = vadd.f32 %v164, 1.0
    %v167 = vmul.f32 %v115, %v165
    %v168 = vmul.f32 %v116, %v166
    %v169 = vpack.c.bf16 %v168, %v167
    %v170 = vld [vmem:[%s4] sm:$0xf]
    %v171 = vld [vmem:[%s4 + $0x4] sm:$0xf]
    %v172 = vld [vmem:[%s5] sm:$0x1]
    %v174 = vlaneseq
    %v175 = vshrl.u32 %v174, 7
    %v176 = vsub.s32 0, %v175
    %v177 = vrot.slane %v172, %v176
    %v181 = vunpack.c.l.b16 %v170
    %v182 = vunpack.c.l.b16 %v171
    %v183 = vpack.c.b16 %v182, %v181
    %vm185 = vcmask 130048
    %v187 = vsel %vm185, %v169, 0
    %189 = vmatprep.subr.bf16.mxu0 0
    %190 = vmatpush1.bf16.msra.mxu0 %v183
    %191 = vmatprep.subr.bf16.mxu0 0
    %192 = vmatpush1.bf16.msra.mxu0 0
    %193 = vmatprep.subr.bf16.mxu0 0
    %194 = vmatpush1.bf16.msra.mxu0 0
    %195 = vmatprep.subr.bf16.mxu0 0
    %196 = vmatpush1.bf16.msra.mxu0 0
    %197 = vmatprep.subr.bf16.mxu0 0
    %198 = vmatpush1.bf16.msra.mxu0 0
    %199 = vmatprep.subr.bf16.mxu0 0
    %200 = vmatpush1.bf16.msra.mxu0 0
    %201 = vmatprep.subr.bf16.mxu0 0
    %202 = vmatpush1.bf16.msra.mxu0 0
    %203 = vmatprep.subr.bf16.mxu0 0
    %204 = vmatpush1.bf16.msra.mxu0 0
    %205 = vmatprep.subr.bf16.mxu0 0
    %206 = vmatpush1.bf16.msra.mxu0 0
    %207 = vmatprep.subr.bf16.mxu0 0
    %208 = vmatpush1.bf16.msra.mxu0 0
    %209 = vmatprep.subr.bf16.mxu0 0
    %210 = vmatpush1.bf16.msra.mxu0 0
    %211 = vmatprep.subr.bf16.mxu0 0
    %212 = vmatpush1.bf16.msra.mxu0 0
    %213 = vmatprep.subr.bf16.mxu0 0
    %214 = vmatpush1.bf16.msra.mxu0 0
    %215 = vmatprep.subr.bf16.mxu0 0
    %216 = vmatpush1.bf16.msra.mxu0 0
    %217 = vmatprep.subr.bf16.mxu0 0
    %218 = vmatpush1.bf16.msra.mxu0 0
    %219 = vmatprep.subr.bf16.mxu0 0
    %220 = vmatpush1.bf16.msra.mxu0 0
    %221 = vmatprep.mubr.bf16.mxu0 0
    %222 = vmatmul.mubr.bf16.gmra.mrb[0].mxu0 %v187
    %v223 = vpop.f32.mrb[0].mxu0
    %v224 = vadd.f32 %v177, %v223
    %v225 = vpop.f32.mrb[0].mxu0
    %v226 = vpop.f32.mrb[0].mxu0
    %v227 = vadd.f32 %v177, %v226
    %v228 = vpop.f32.mrb[0].mxu0
    %229 = vdwg.mxu0
    %v230 = vld [vmem:[%s1] sm:$0xff]
    %v231 = vld [vmem:[%s1 + $0x8] sm:$0xff]
    %v232 = vadd.f32 %v224, %v230
    %v233 = vadd.f32 %v227, %v231
    %234 = vmax.xlane.f32.xlu0 %v232
    %v235 = vpop.xlane.xlu0 %234
    %236 = vmax.xlane.f32.xlu0 %v233
    %v237 = vpop.xlane.xlu0 %236
    %v238 = vsub.f32 %v232, %v235
    %v239 = vsub.f32 %v233, %v237
    %v240 = vmul.f32 %v238, 1.442695
    %v241 = vpow.pop %v240
    %v242 = vmul.f32 %v239, 1.442695
    %v243 = vpow.pop %v242
    %244 = vadd.xlane.f32.xlu0 %v241
    %v245 = vpop.xlane.xlu0 %244
    %246 = vadd.xlane.f32.xlu0 %v243
    %v247 = vpop.xlane.xlu0 %246
    %v248 = vrcp.pop %v245
    %v249 = vrcp.pop %v247
    %v250 = vmul.f32 %v241, %v248
    %v251 = vmul.f32 %v243, %v249
    %252 = vst [vmem:[#allocation2] sm:$0xff] %v250
    %253 = vst [vmem:[#allocation2 + $0x8] sm:$0xff] %v251
    %v254 = vld [vmem:[%s6] sm:$0xf]
    %v255 = vld [vmem:[%s6 + $0x4] sm:$0xf]
    %v256 = vld [vmem:[%s6 + $0x8] sm:$0xf]
    %v257 = vld [vmem:[%s6 + $0xc] sm:$0xf]
    %v258 = vld [vmem:[%s7] sm:$0x1]
    %v260 = vlaneseq
    %v261 = vshrl.u32 %v260, 7
    %v262 = vsub.s32 0, %v261
    %v263 = vrot.slane %v258, %v262
    %v269 = vunpack.c.l.b16 %v254
    %v270 = vunpack.c.l.b16 %v255
    %v271 = vunpack.c.l.b16 %v256
    %v272 = vunpack.c.l.b16 %v257
    %v273 = vpack.c.b16 %v270, %v269
    %v274 = vpack.c.b16 %v272, %v271
    %277 = vmatprep.subr.bf16.mxu0 0
    %278 = vmatpush1.bf16.msra.mxu0 %v273
    %279 = vmatprep.subr.bf16.mxu0 0
    %280 = vmatpush1.bf16.msra.mxu0 %v274
    %281 = vmatprep.subr.bf16.mxu0 0
    %282 = vmatpush1.bf16.msra.mxu0 0
    %283 = vmatprep.subr.bf16.mxu0 0
    %284 = vmatpush1.bf16.msra.mxu0 0
    %285 = vmatprep.subr.bf16.mxu0 0
    %286 = vmatpush1.bf16.msra.mxu0 0
    %287 = vmatprep.subr.bf16.mxu0 0
    %288 = vmatpush1.bf16.msra.mxu0 0
    %289 = vmatprep.subr.bf16.mxu0 0
    %290 = vmatpush1.bf16.msra.mxu0 0
    %291 = vmatprep.subr.bf16.mxu0 0
    %292 = vmatpush1.bf16.msra.mxu0 0
    %293 = vmatprep.subr.bf16.mxu0 0
    %294 = vmatpush1.bf16.msra.mxu0 0
    %295 = vmatprep.subr.bf16.mxu0 0
    %296 = vmatpush1.bf16.msra.mxu0 0
    %297 = vmatprep.subr.bf16.mxu0 0
    %298 = vmatpush1.bf16.msra.mxu0 0
    %299 = vmatprep.subr.bf16.mxu0 0
    %300 = vmatpush1.bf16.msra.mxu0 0
    %301 = vmatprep.subr.bf16.mxu0 0
    %302 = vmatpush1.bf16.msra.mxu0 0
    %303 = vmatprep.subr.bf16.mxu0 0
    %304 = vmatpush1.bf16.msra.mxu0 0
    %305 = vmatprep.subr.bf16.mxu0 0
    %306 = vmatpush1.bf16.msra.mxu0 0
    %307 = vmatprep.subr.bf16.mxu0 0
    %308 = vmatpush1.bf16.msra.mxu0 0
    %309 = vmatprep.mubr.bf16.mxu0 0
    %310 = vmatmul.mubr.bf16.gmra.mrb[0].mxu0 %v72
    %v311 = vpop.f32.mrb[0].mxu0
    %v312 = vadd.f32 %v263, %v311
    %v313 = vpop.f32.mrb[0].mxu0
    %v314 = vpop.f32.mrb[0].mxu0
    %v315 = vadd.f32 %v263, %v314
    %v316 = vpop.f32.mrb[0].mxu0
    %317 = vdwg.mxu0
    %v318 = vmul.f32 %v312, 0.5
    %v319 = vmul.f32 %v315, 0.5
    %v320 = vmul.f32 %v312, 0.70710677
    %v321 = vmul.f32 %v315, 0.70710677
    %v322 = vand.u32 2147483647, %v320
    %v323 = vand.u32 2147483647, %v321
    %v324 = vmul.f32 %v322, 0.3275911
    %v325 = vmul.f32 %v323, 0.3275911
    %v326 = vadd.f32 %v324, 1.0
    %v327 = vadd.f32 %v325, 1.0
    %v328 = vrcp.pop %v326
    %v329 = vmul.f32 1.0, %v328
    %v330 = vrcp.pop %v327
    %v331 = vmul.f32 1.0, %v330
    %v332 = vmul.f32 %v329, 1.0614054
    %v333 = vmul.f32 %v331, 1.0614054
    %v334 = vadd.f32 %v332, -1.4531521
    %v335 = vadd.f32 %v333, -1.4531521
    %v336 = vmul.f32 %v334, %v329
    %v337 = vmul.f32 %v335, %v331
    %v338 = vadd.f32 %v336, 1.4214138
    %v339 = vadd.f32 %v337, 1.4214138
    %v340 = vmul.f32 %v338, %v329
    %v341 = vmul.f32 %v339, %v331
    %v342 = vadd.f32 %v340, -0.28449672
    %v343 = vadd.f32 %v341, -0.28449672
    %v344 = vmul.f32 %v342, %v329
    %v345 = vmul.f32 %v343, %v331
    %v346 = vadd.f32 %v344, 0.2548296
    %v347 = vadd.f32 %v345, 0.2548296
    %v348 = vmul.f32 %v346, %v329
    %v349 = vmul.f32 %v347, %v331
    %v350 = vsub.f32 0.0, %v322
    %v351 = vsub.f32 0.0, %v323
    %v352 = vmul.f32 %v350, %v322
    %v353 = vmul.f32 %v351, %v323
    %v354 = vmul.f32 %v352, 1.442695
    %v355 = vpow.pop %v354
    %v356 = vmul.f32 %v353, 1.442695
    %v357 = vpow.pop %v356
    %v358 = vmul.f32 %v348, %v355
    %v359 = vmul.f32 %v349, %v357
    %v360 = vsub.f32 1.0, %v358
    %v361 = vsub.f32 1.0, %v359
    %vm362 = vcmp.ge.f32.partialorder %v320, 0.0
    %vm363 = vcmp.ge.f32.partialorder %v321, 0.0
    %v364 = vsub.f32 0.0, %v360
    %v365 = vsub.f32 0.0, %v361
    %v366 = vsel %vm362, %v360, %v364
    %v367 = vsel %vm363, %v361, %v365
    %v368 = vadd.f32 %v366, 1.0
    %v369 = vadd.f32 %v367, 1.0
    %v370 = vmul.f32 %v318, %v368
    %v371 = vmul.f32 %v319, %v369
    %v372 = vpack.c.bf16 %v371, %v370
    %v373 = vld [vmem:[%s8] sm:$0xf]
    %v374 = vld [vmem:[%s8 + $0x4] sm:$0xf]
    %v375 = vld [vmem:[%s9] sm:$0x1]
    %v377 = vlaneseq
    %v378 = vshrl.u32 %v377, 7
    %v379 = vsub.s32 0, %v378
    %v380 = vrot.slane %v375, %v379
    %v384 = vunpack.c.l.b16 %v373
    %v385 = vunpack.c.l.b16 %v374
    %v386 = vpack.c.b16 %v385, %v384
    %v389 = vsel %vm185, %v372, 0
    %391 = vmatprep.subr.bf16.mxu0 0
    %392 = vmatpush1.bf16.msra.mxu0 %v386
    %393 = vmatprep.subr.bf16.mxu0 0
    %394 = vmatpush1.bf16.msra.mxu0 0
    %395 = vmatprep.subr.bf16.mxu0 0
    %396 = vmatpush1.bf16.msra.mxu0 0
    %397 = vmatprep.subr.bf16.mxu0 0
    %398 = vmatpush1.bf16.msra.mxu0 0
    %399 = vmatprep.subr.bf16.mxu0 0
    %400 = vmatpush1.bf16.msra.mxu0 0
    %401 = vmatprep.subr.bf16.mxu0 0
    %402 = vmatpush1.bf16.msra.mxu0 0
    %403 = vmatprep.subr.bf16.mxu0 0
    %404 = vmatpush1.bf16.msra.mxu0 0
    %405 = vmatprep.subr.bf16.mxu0 0
    %406 = vmatpush1.bf16.msra.mxu0 0
    %407 = vmatprep.subr.bf16.mxu0 0
    %408 = vmatpush1.bf16.msra.mxu0 0
    %409 = vmatprep.subr.bf16.mxu0 0
    %410 = vmatpush1.bf16.msra.mxu0 0
    %411 = vmatprep.subr.bf16.mxu0 0
    %412 = vmatpush1.bf16.msra.mxu0 0
    %413 = vmatprep.subr.bf16.mxu0 0
    %414 = vmatpush1.bf16.msra.mxu0 0
    %415 = vmatprep.subr.bf16.mxu0 0
    %416 = vmatpush1.bf16.msra.mxu0 0
    %417 = vmatprep.subr.bf16.mxu0 0
    %418 = vmatpush1.bf16.msra.mxu0 0
    %419 = vmatprep.subr.bf16.mxu0 0
    %420 = vmatpush1.bf16.msra.mxu0 0
    %421 = vmatprep.subr.bf16.mxu0 0
    %422 = vmatpush1.bf16.msra.mxu0 0
    %423 = vmatprep.mubr.bf16.mxu0 0
    %424 = vmatmul.mubr.bf16.gmra.mrb[0].mxu0 %v389
    %v425 = vpop.f32.mrb[0].mxu0
    %v426 = vadd.f32 %v380, %v425
    %v427 = vpop.f32.mrb[0].mxu0
    %v428 = vpop.f32.mrb[0].mxu0
    %v429 = vadd.f32 %v380, %v428
    %v430 = vpop.f32.mrb[0].mxu0
    %431 = vdwg.mxu0
    %432 = vst [vmem:[#allocation4] sm:$0xff] %v426
    %433 = vst [vmem:[#allocation4 + $0x8] sm:$0xff] %v429
    // Predicated region
    $region42: #{tpu_custom_call.1} parent=1 // pred_check
      _
    $region43: #{tpu_custom_call.1} parent=1 // pred_check_branch
      %435 = sbr.rel (0) target = $region45
    $region44: #{tpu_custom_call.1} parent=1 // pred_region
      %s437 = ssub.s32 256, 256
      %438 = vsyncadd [#allocation3], %s437
      %s439 = sshll.u32 [#allocation2], 4
      %s440 = int_to_ptr.vmem [resolvable:$true] %s439
      %445 = dma.vmem_to_hbm [thread:$0]  %s440, 256, %s10, [#allocation3], 128, 128, 8
    $region45: #{tpu_custom_call.1} parent=1 // pred_fallthru
      _
    // Predicated region
    $region46: #{tpu_custom_call.1} parent=1 // pred_check
      _
    $region47: #{tpu_custom_call.1} parent=1 // pred_check_branch
      %447 = sbr.rel (0) target = $region49
    $region48: #{tpu_custom_call.1} parent=1 // pred_region
      %s449 = ssub.s32 256, 256
      %450 = vsyncadd [#allocation5], %s449
      %s451 = sshll.u32 [#allocation4], 4
      %s452 = int_to_ptr.vmem [resolvable:$true] %s451
      %457 = dma.vmem_to_hbm [thread:$0]  %s452, 256, %s11, [#allocation5], 128, 128, 8
    $region49: #{tpu_custom_call.1} parent=1 // pred_fallthru
      _
    // Predicated region
    $region50: #{tpu_custom_call.1} parent=1 // pred_check
      _
    $region51: #{tpu_custom_call.1} parent=1 // pred_check_branch
      %459 = sbr.rel (0) target = $region53
    $region52: #{tpu_custom_call.1} parent=1 // pred_region
      %460 = dma.done [#allocation3], 256
    $region53: #{tpu_custom_call.1} parent=1 // pred_fallthru
      _
    // Predicated region
    $region54: #{tpu_custom_call.1} parent=1 // pred_check
      _
    $region55: #{tpu_custom_call.1} parent=1 // pred_check_branch
      %462 = sbr.rel (0) target = $region57
    $region56: #{tpu_custom_call.1} parent=1 // pred_region
      %463 = dma.done [#allocation5], 256
    $region57: #{tpu_custom_call.1} parent=1 // pred_fallthru
      _
    %464 = vsyncpa [#allocation3], 1
    %465 = vsyncpa [#allocation5], 1

</llo_original>
